<compile_context>
chip_gen: v5e
topology: v5e:2x2
jax: 0.10.0
libtpu: 0.0.40
codegen_flags: <defaults>
</compile_context>

<pallas_src>
import jax
import jax.numpy as jnp
from jax.experimental import pallas as pl
from jax.experimental.pallas import tpu as pltpu

_OUT_WIDTH = 128  # lane-dense output width (real logits live in columns [:2])


def _linear_kernel(x_ref, w_ref, b_ref, o_ref):
    # x_ref: (TILE_N, D)        in VMEM (pipelined over the grid)
    # w_ref: (D, 128)  f32      in VMEM (resident, zero-padded past col 2)
    # b_ref: (1, 128)  f32      in VMEM (resident, zero-padded past col 2)
    # o_ref: (TILE_N, 128) f32  in VMEM
    acc = jnp.dot(x_ref[...], w_ref[...], preferred_element_type=jnp.float32)
    o_ref[...] = acc + b_ref[...]


def _round_up(n, m):
    return ((n + m - 1) // m) * m


def ood_detector_forward(x, w_t, b, *, tile_n=512):
    """y = x @ w_t + b   (nn.Linear(input_size, 2) forward)

    x   : (N, D)  float32 (or bfloat16)
    w_t : (D, 2)  float32   (transpose of PyTorch fc.weight of shape (2, D))
    b   : (2,) or (1, 2) float32
    returns (N, 2) float32
    """
    N, D = x.shape
    out_dim = w_t.shape[1]

    # Zero-pad weight/bias to a lane-dense 128-wide output slab.
    w_pad = jnp.zeros((D, _OUT_WIDTH), x.dtype).at[:, :out_dim].set(
        w_t.astype(x.dtype))
    b_pad = jnp.zeros((1, _OUT_WIDTH), jnp.float32).at[:, :out_dim].set(
        jnp.reshape(b, (1, out_dim)).astype(jnp.float32))

    # Choose a tile that is a multiple of 8 and no larger than needed; pad N
    # so every grid step sees a full block (ragged tail handled by slicing).
    tn = min(tile_n, _round_up(N, 8))
    n_pad = _round_up(N, tn)
    if n_pad != N:
        x = jnp.pad(x, ((0, n_pad - N), (0, 0)))

    y = pl.pallas_call(
        _linear_kernel,
        out_shape=jax.ShapeDtypeStruct((n_pad, _OUT_WIDTH), jnp.float32),
        grid=(n_pad // tn,),
        in_specs=[
            pl.BlockSpec((tn, D), lambda i: (i, 0)),          # x: streamed
            pl.BlockSpec((D, _OUT_WIDTH), lambda i: (0, 0)),  # w: resident
            pl.BlockSpec((1, _OUT_WIDTH), lambda i: (0, 0)),  # b: resident
        ],
        out_specs=pl.BlockSpec((tn, _OUT_WIDTH), lambda i: (i, 0)),
        compiler_params=pltpu.CompilerParams(
            dimension_semantics=("parallel",),
        ),
    )(x, w_pad, b_pad)

    return y[:N, :out_dim]


def init_params(key, input_size=512, out_features=2):
    # Deterministic init matching nn.Linear's uniform(-1/sqrt(fan_in), ...).
    kw, kb = jax.random.split(key)
    bound = 1.0 / jnp.sqrt(jnp.float32(input_size))
    # PyTorch weight is (out_features, in_features); store its transpose.
    w_t = jax.random.uniform(kw, (input_size, out_features), jnp.float32,
                             -bound, bound)
    b = jax.random.uniform(kb, (1, out_features), jnp.float32, -bound, bound)
    return w_t, b


if __name__ == "__main__":
    key = jax.random.PRNGKey(0)
    k_x, k_p = jax.random.split(key)

    batch = 8
    input_size = 512  # module default

    x = jax.random.normal(k_x, (batch, input_size), jnp.float32)
    w_t, b = init_params(k_p, input_size=input_size, out_features=2)

    y = ood_detector_forward(x, w_t, b)
    jax.block_until_ready(y)

    # Sanity check against plain JAX reference.
    y_ref = x @ w_t + b
    assert y.shape == (batch, 2)
    assert jnp.allclose(y, y_ref, atol=1e-5, rtol=1e-5)

    # Also exercise a larger, ragged batch to cover the tiled/padded path.
    big_n = 1037
    xb = jax.random.normal(jax.random.PRNGKey(1), (big_n, input_size),
                           jnp.float32)
    yb = ood_detector_forward(xb, w_t, b)
    jax.block_until_ready(yb)
    yb_ref = xb @ w_t + b
    assert yb.shape == (big_n, 2)
    assert jnp.allclose(yb, yb_ref, atol=1e-4, rtol=1e-4)

    print("KERNEL_OK")
</pallas_src>

<mosaic_0001>
module attributes {stable_mosaic.version = 11 : i64} {
  func.func @_linear_kernel(%arg0: i32, %arg1: memref<8x512xf32, #tpu.memory_space<vmem>>, %arg2: memref<512x128xf32, #tpu.memory_space<vmem>>, %arg3: memref<1x128xf32, #tpu.memory_space<vmem>>, %arg4: memref<8x128xf32, #tpu.memory_space<vmem>>) attributes {dimension_semantics = [#tpu.dimension_semantics<parallel>], iteration_bounds = array<i64: 1>, scalar_prefetch = 0 : i64, scratch_operands = 0 : i64, tpu.core_type = #tpu.core_type<tc>, window_params = [{transform_indices = @transform_0, window_bounds = array<i64: 8, 512>}, {pipeline_mode = #tpu.pipeline_mode<synchronous>, transform_indices = @transform_1, window_bounds = array<i64: 512, 128>}, {pipeline_mode = #tpu.pipeline_mode<synchronous>, transform_indices = @transform_2, window_bounds = array<i64: 1, 128>}, {transform_indices = @transform_3, window_bounds = array<i64: 8, 128>}]} {
    %c0 = arith.constant 0 : index
    %c0_0 = arith.constant 0 : index
    %0 = vector.load %arg1[%c0, %c0_0] : memref<8x512xf32, #tpu.memory_space<vmem>>, vector<8x512xf32>
    %c0_1 = arith.constant 0 : index
    %c0_2 = arith.constant 0 : index
    %1 = vector.load %arg2[%c0_1, %c0_2] : memref<512x128xf32, #tpu.memory_space<vmem>>, vector<512x128xf32>
    %cst = arith.constant dense<0.000000e+00> : vector<8x128xf32>
    %2 = tpu.matmul %0, %1, %cst {dimension_numbers = #tpu.dot_dimension_numbers<[1], [0], [0], [1], [0, 0, 1, 1], [], []>} : vector<8x512xf32>, vector<512x128xf32>, vector<8x128xf32> -> vector<8x128xf32>
    %c0_3 = arith.constant 0 : index
    %c0_4 = arith.constant 0 : index
    %3 = vector.load %arg3[%c0_3, %c0_4] : memref<1x128xf32, #tpu.memory_space<vmem>>, vector<1x128xf32>
    %4 = vector.broadcast %3 : vector<1x128xf32> to vector<8x128xf32>
    %5 = arith.addf %2, %4 : vector<8x128xf32>
    %c0_5 = arith.constant 0 : index
    %c0_6 = arith.constant 0 : index
    %6 = vector.load %arg4[%c0_5, %c0_6] : memref<8x128xf32, #tpu.memory_space<vmem>>, vector<8x128xf32>
    tpu.vector_store %arg4[%c0_5, %c0_6], %5 {strides = array<i32>} : memref<8x128xf32, #tpu.memory_space<vmem>>, vector<8x128xf32>,
    return
  }
  func.func @transform_0(%arg0: i32) -> (i32, i32) {
    %c0_i32 = arith.constant 0 : i32
    %c0_i32_0 = arith.constant 0 : i32
    return %arg0, %c0_i32 : i32, i32
  }
  func.func @transform_1(%arg0: i32) -> (i32, i32) {
    %c0_i32 = arith.constant 0 : i32
    %c0_i32_0 = arith.constant 0 : i32
    %c0_i32_1 = arith.constant 0 : i32
    return %c0_i32, %c0_i32_0 : i32, i32
  }
  func.func @transform_2(%arg0: i32) -> (i32, i32) {
    %c0_i32 = arith.constant 0 : i32
    %c0_i32_0 = arith.constant 0 : i32
    %c0_i32_1 = arith.constant 0 : i32
    return %c0_i32, %c0_i32_0 : i32, i32
  }
  func.func @transform_3(%arg0: i32) -> (i32, i32) {
    %c0_i32 = arith.constant 0 : i32
    %c0_i32_0 = arith.constant 0 : i32
    return %arg0, %c0_i32 : i32, i32
  }
}

</mosaic_0001>

<llo_original>
// kernel: tpu_custom_call.1
$region0: #{tpu_custom_call.1}
  #allocation0 [shape = 'u32[]', space=smem, size = 0x4, offset = 0x4, fixed_abs, tag = 'smem constant byte address 0x4 - core index']
  #allocation1 [shape = 'u32[72,128]{1,0:T(1,128)}', space=vmem, size = 0x9000, scoped, tag = 'internal scratch']
  %s0 = inlined_call_operand.hbm [shape: f32[8,512], index: 0, kind: input, shape index: {}]
  %s1 = inlined_call_operand.hbm [shape: f32[512,128], index: 1, kind: input, shape index: {}]
  %s2 = inlined_call_operand.vmem [shape: f32[1,128], index: 2, kind: input, shape index: {}]
  %s3 = inlined_call_operand.hbm [shape: f32[8,128], index: 3, kind: output, shape index: {}]
  %s4 = sld [smem:[#allocation0]]
  $region30: #{tpu_custom_call.1} parent=0
    _
  %s6 = ssub.s32 1, %s4
  %s7 = scalar_select 0, %s6, %s4
  $region1: #{tpu_custom_call.1} parent=0
    #allocation2 [shape = 'u8[16384]{0}', space=vmem, size = 0x4000, scoped, tag = 'input window, operand 0, single buffered']
    #allocation3 [shape = 's32[1]{0}', space=sflag, size = 0x4, scoped, tag = 'scoped memory for tpu_custom_call.1']
    #allocation4 [shape = 's32[1]{0}', space=sflag, size = 0x4, scoped, tag = 'scoped memory for tpu_custom_call.1']
    #allocation5 [shape = 'u8[262144]{0}', space=vmem, size = 0x40000, scoped, tag = 'input window, operand 1, single buffered']
    #allocation6 [shape = 's32[1]{0}', space=sflag, size = 0x4, scoped, tag = 'scoped memory for tpu_custom_call.1']
    #allocation7 [shape = 'u8[4096]{0}', space=vmem, size = 0x1000, scoped, tag = 'output window, operand 0, single buffered']
    %8 = vsyncpa [#allocation3], 0
    %9 = vsyncpa [#allocation6], 0
    %10 = vsyncpa [#allocation4], 0
    // Predicated region
    $region2: #{tpu_custom_call.1} parent=1 // pred_check
      _
    $region3: #{tpu_custom_call.1} parent=1 // pred_check_branch
      %12 = sbr.rel (0) target = $region5
    $region4: #{tpu_custom_call.1} parent=1 // pred_region
      %14 = vsyncadd [#allocation3], 0
      %s16 = sshll.u32 %s0, 4
      %s17 = int_to_ptr.hbm [resolvable:$true] %s16
      %s18 = sshll.u32 [#allocation2], 4
      %s19 = int_to_ptr.vmem [resolvable:$true] %s18
      %21 = dma.hbm_to_vmem [thread:$0]  %s17, 512, %s19, [#allocation3]
    $region5: #{tpu_custom_call.1} parent=1 // pred_fallthru
      _
    // Predicated region
    $region6: #{tpu_custom_call.1} parent=1 // pred_check
      _
    $region7: #{tpu_custom_call.1} parent=1 // pred_check_branch
      %23 = sbr.rel (0) target = $region9
    $region8: #{tpu_custom_call.1} parent=1 // pred_region
      %25 = vsyncadd [#allocation6], 0
      %s26 = sshll.u32 %s1, 4
      %s27 = int_to_ptr.hbm [resolvable:$true] %s26
      %s28 = sshll.u32 [#allocation5], 4
      %s29 = int_to_ptr.vmem [resolvable:$true] %s28
      %34 = dma.hbm_to_vmem [thread:$0]  %s27, 8192, %s29, [#allocation6], 128, 128, 8
    $region9: #{tpu_custom_call.1} parent=1 // pred_fallthru
      _
    // Predicated region
    $region10: #{tpu_custom_call.1} parent=1 // pred_check
      _
    $region11: #{tpu_custom_call.1} parent=1 // pred_check_branch
      %36 = sbr.rel (0) target = $region13
    $region12: #{tpu_custom_call.1} parent=1 // pred_region
      _
    $region13: #{tpu_custom_call.1} parent=1 // pred_fallthru
      _
    // Predicated region
    $region14: #{tpu_custom_call.1} parent=1 // pred_check
      _
    $region15: #{tpu_custom_call.1} parent=1 // pred_check_branch
      %38 = sbr.rel (0) target = $region17
    $region16: #{tpu_custom_call.1} parent=1 // pred_region
      %40 = dma.done [#allocation3], 512
    $region17: #{tpu_custom_call.1} parent=1 // pred_fallthru
      _
    // Predicated region
    $region18: #{tpu_custom_call.1} parent=1 // pred_check
      _
    $region19: #{tpu_custom_call.1} parent=1 // pred_check_branch
      %42 = sbr.rel (0) target = $region21
    $region20: #{tpu_custom_call.1} parent=1 // pred_region
      %44 = dma.done [#allocation6], 8192
    $region21: #{tpu_custom_call.1} parent=1 // pred_fallthru
      _
    %v45 = vld [vmem:[#allocation2] sm:$0xff]
    %v46 = vld [vmem:[#allocation2 + $0x8] sm:$0xff]
    %v47 = vld [vmem:[#allocation2 + $0x10] sm:$0xff]
    %v48 = vld [vmem:[#allocation2 + $0x18] sm:$0xff]
    %v49 = vld [vmem:[#allocation5] sm:$0xff]
    %v50 = vld [vmem:[#allocation5 + $0x8] sm:$0xff]
    %v51 = vld [vmem:[#allocation5 + $0x10] sm:$0xff]
    %v52 = vld [vmem:[#allocation5 + $0x18] sm:$0xff]
    %v53 = vld [vmem:[#allocation5 + $0x20] sm:$0xff]
    %v54 = vld [vmem:[#allocation5 + $0x28] sm:$0xff]
    %v55 = vld [vmem:[#allocation5 + $0x30] sm:$0xff]
    %v56 = vld [vmem:[#allocation5 + $0x38] sm:$0xff]
    %v57 = vld [vmem:[#allocation5 + $0x40] sm:$0xff]
    %v58 = vld [vmem:[#allocation5 + $0x48] sm:$0xff]
    %v59 = vld [vmem:[#allocation5 + $0x50] sm:$0xff]
    %v60 = vld [vmem:[#allocation5 + $0x58] sm:$0xff]
    %v61 = vld [vmem:[#allocation5 + $0x60] sm:$0xff]
    %v62 = vld [vmem:[#allocation5 + $0x68] sm:$0xff]
    %v63 = vld [vmem:[#allocation5 + $0x70] sm:$0xff]
    %v64 = vld [vmem:[#allocation5 + $0x78] sm:$0xff]
    %v65 = vld [vmem:[#allocation5 + $0x80] sm:$0xff]
    %v66 = vld [vmem:[#allocation5 + $0x88] sm:$0xff]
    %v67 = vld [vmem:[#allocation5 + $0x90] sm:$0xff]
    %v68 = vld [vmem:[#allocation5 + $0x98] sm:$0xff]
    %v69 = vld [vmem:[#allocation5 + $0xa0] sm:$0xff]
    %v70 = vld [vmem:[#allocation5 + $0xa8] sm:$0xff]
    %v71 = vld [vmem:[#allocation5 + $0xb0] sm:$0xff]
    %v72 = vld [vmem:[#allocation5 + $0xb8] sm:$0xff]
    %v73 = vld [vmem:[#allocation5 + $0xc0] sm:$0xff]
    %v74 = vld [vmem:[#allocation5 + $0xc8] sm:$0xff]
    %v75 = vld [vmem:[#allocation5 + $0xd0] sm:$0xff]
    %v76 = vld [vmem:[#allocation5 + $0xd8] sm:$0xff]
    %v77 = vld [vmem:[#allocation5 + $0xe0] sm:$0xff]
    %v78 = vld [vmem:[#allocation5 + $0xe8] sm:$0xff]
    %v79 = vld [vmem:[#allocation5 + $0xf0] sm:$0xff]
    %v80 = vld [vmem:[#allocation5 + $0xf8] sm:$0xff]
    %v81 = vld [vmem:[#allocation5 + $0x100] sm:$0xff]
    %v82 = vld [vmem:[#allocation5 + $0x108] sm:$0xff]
    %v83 = vld [vmem:[#allocation5 + $0x110] sm:$0xff]
    %v84 = vld [vmem:[#allocation5 + $0x118] sm:$0xff]
    %v85 = vld [vmem:[#allocation5 + $0x120] sm:$0xff]
    %v86 = vld [vmem:[#allocation5 + $0x128] sm:$0xff]
    %v87 = vld [vmem:[#allocation5 + $0x130] sm:$0xff]
    %v88 = vld [vmem:[#allocation5 + $0x138] sm:$0xff]
    %v89 = vld [vmem:[#allocation5 + $0x140] sm:$0xff]
    %v90 = vld [vmem:[#allocation5 + $0x148] sm:$0xff]
    %v91 = vld [vmem:[#allocation5 + $0x150] sm:$0xff]
    %v92 = vld [vmem:[#allocation5 + $0x158] sm:$0xff]
    %v93 = vld [vmem:[#allocation5 + $0x160] sm:$0xff]
    %v94 = vld [vmem:[#allocation5 + $0x168] sm:$0xff]
    %v95 = vld [vmem:[#allocation5 + $0x170] sm:$0xff]
    %v96 = vld [vmem:[#allocation5 + $0x178] sm:$0xff]
    %v97 = vld [vmem:[#allocation5 + $0x180] sm:$0xff]
    %v98 = vld [vmem:[#allocation5 + $0x188] sm:$0xff]
    %v99 = vld [vmem:[#allocation5 + $0x190] sm:$0xff]
    %v100 = vld [vmem:[#allocation5 + $0x198] sm:$0xff]
    %v101 = vld [vmem:[#allocation5 + $0x1a0] sm:$0xff]
    %v102 = vld [vmem:[#allocation5 + $0x1a8] sm:$0xff]
    %v103 = vld [vmem:[#allocation5 + $0x1b0] sm:$0xff]
    %v104 = vld [vmem:[#allocation5 + $0x1b8] sm:$0xff]
    %v105 = vld [vmem:[#allocation5 + $0x1c0] sm:$0xff]
    %v106 = vld [vmem:[#allocation5 + $0x1c8] sm:$0xff]
    %v107 = vld [vmem:[#allocation5 + $0x1d0] sm:$0xff]
    %v108 = vld [vmem:[#allocation5 + $0x1d8] sm:$0xff]
    %v109 = vld [vmem:[#allocation5 + $0x1e0] sm:$0xff]
    %v110 = vld [vmem:[#allocation5 + $0x1e8] sm:$0xff]
    %v111 = vld [vmem:[#allocation5 + $0x1f0] sm:$0xff]
    %v112 = vld [vmem:[#allocation5 + $0x1f8] sm:$0xff]
    %v113 = vld [vmem:[%s2] sm:$0x1]
    %v115 = vperm.slane %v113, 0
    %117 = vmatpush.msra.mxu0 %v64
    %118 = vmatpush.msra.mxu0 %v63
    %119 = vmatpush.msra.mxu0 %v62
    %120 = vmatpush.msra.mxu0 %v61
    %121 = vmatpush.msra.mxu0 %v60
    %122 = vmatpush.msra.mxu0 %v59
    %123 = vmatpush.msra.mxu0 %v58
    %124 = vmatpush.msra.mxu0 %v57
    %125 = vmatpush.msra.mxu0 %v56
    %126 = vmatpush.msra.mxu0 %v55
    %127 = vmatpush.msra.mxu0 %v54
    %128 = vmatpush.msra.mxu0 %v53
    %129 = vmatpush.msra.mxu0 %v52
    %130 = vmatpush.msra.mxu0 %v51
    %131 = vmatpush.msra.mxu0 %v50
    %132 = vmatpush.msra.mxu0 %v49
    %133 = vmatmul.f32.gmra.mxu0 %v45
    %v134 = vpop.f32.mrf.mxu0
    %v135 = vadd.f32 %v115, %v134
    %136 = vdwg.mxu0
    %137 = vmatpush.msra.mxu0 %v80
    %138 = vmatpush.msra.mxu0 %v79
    %139 = vmatpush.msra.mxu0 %v78
    %140 = vmatpush.msra.mxu0 %v77
    %141 = vmatpush.msra.mxu0 %v76
    %142 = vmatpush.msra.mxu0 %v75
    %143 = vmatpush.msra.mxu0 %v74
    %144 = vmatpush.msra.mxu0 %v73
    %145 = vmatpush.msra.mxu0 %v72
    %146 = vmatpush.msra.mxu0 %v71
    %147 = vmatpush.msra.mxu0 %v70
    %148 = vmatpush.msra.mxu0 %v69
    %149 = vmatpush.msra.mxu0 %v68
    %150 = vmatpush.msra.mxu0 %v67
    %151 = vmatpush.msra.mxu0 %v66
    %152 = vmatpush.msra.mxu0 %v65
    %153 = vmatmul.f32.gmra.mxu0 %v46
    %v154 = vpop.f32.mrf.mxu0
    %v155 = vadd.f32 %v135, %v154
    %156 = vdwg.mxu0
    %157 = vmatpush.msra.mxu0 %v96
    %158 = vmatpush.msra.mxu0 %v95
    %159 = vmatpush.msra.mxu0 %v94
    %160 = vmatpush.msra.mxu0 %v93
    %161 = vmatpush.msra.mxu0 %v92
    %162 = vmatpush.msra.mxu0 %v91
    %163 = vmatpush.msra.mxu0 %v90
    %164 = vmatpush.msra.mxu0 %v89
    %165 = vmatpush.msra.mxu0 %v88
    %166 = vmatpush.msra.mxu0 %v87
    %167 = vmatpush.msra.mxu0 %v86
    %168 = vmatpush.msra.mxu0 %v85
    %169 = vmatpush.msra.mxu0 %v84
    %170 = vmatpush.msra.mxu0 %v83
    %171 = vmatpush.msra.mxu0 %v82
    %172 = vmatpush.msra.mxu0 %v81
    %173 = vmatmul.f32.gmra.mxu0 %v47
    %v174 = vpop.f32.mrf.mxu0
    %v175 = vadd.f32 %v155, %v174
    %176 = vdwg.mxu0
    %177 = vmatpush.msra.mxu0 %v112
    %178 = vmatpush.msra.mxu0 %v111
    %179 = vmatpush.msra.mxu0 %v110
    %180 = vmatpush.msra.mxu0 %v109
    %181 = vmatpush.msra.mxu0 %v108
    %182 = vmatpush.msra.mxu0 %v107
    %183 = vmatpush.msra.mxu0 %v106
    %184 = vmatpush.msra.mxu0 %v105
    %185 = vmatpush.msra.mxu0 %v104
    %186 = vmatpush.msra.mxu0 %v103
    %187 = vmatpush.msra.mxu0 %v102
    %188 = vmatpush.msra.mxu0 %v101
    %189 = vmatpush.msra.mxu0 %v100
    %190 = vmatpush.msra.mxu0 %v99
    %191 = vmatpush.msra.mxu0 %v98
    %192 = vmatpush.msra.mxu0 %v97
    %193 = vmatmul.f32.gmra.mxu0 %v48
    %v194 = vpop.f32.mrf.mxu0
    %v195 = vadd.f32 %v175, %v194
    %196 = vdwg.mxu0
    %197 = vst [vmem:[#allocation7] sm:$0xff] %v195
    // Predicated region
    $region22: #{tpu_custom_call.1} parent=1 // pred_check
      _
    $region23: #{tpu_custom_call.1} parent=1 // pred_check_branch
      %199 = sbr.rel (0) target = $region25
    $region24: #{tpu_custom_call.1} parent=1 // pred_region
      %201 = vsyncadd [#allocation4], 0
      %s203 = sshll.u32 [#allocation7], 4
      %s204 = int_to_ptr.vmem [resolvable:$true] %s203
      %s205 = sshll.u32 %s3, 4
      %s206 = int_to_ptr.hbm [resolvable:$true] %s205
      %208 = dma.vmem_to_hbm [thread:$0]  %s204, 128, %s206, [#allocation4]
    $region25: #{tpu_custom_call.1} parent=1 // pred_fallthru
      _
    // Predicated region
    $region26: #{tpu_custom_call.1} parent=1 // pred_check
      _
    $region27: #{tpu_custom_call.1} parent=1 // pred_check_branch
      %210 = sbr.rel (0) target = $region29
    $region28: #{tpu_custom_call.1} parent=1 // pred_region
      %212 = dma.done [#allocation4], 128
    $region29: #{tpu_custom_call.1} parent=1 // pred_fallthru
      _
    %213 = vsyncpa [#allocation3], 1
    %214 = vsyncpa [#allocation6], 1
    %215 = vsyncpa [#allocation4], 1

</llo_original>
